<compile_context>
chip_gen: v7x
topology: tpu7x:2x2x1
jax: 0.10.0
libtpu: 0.0.40
codegen_flags: <defaults>
</compile_context>

<pallas_src>
import functools

import numpy as np
import jax
import jax.numpy as jnp
from jax.experimental import pallas as pl
from jax.experimental.pallas import tpu as pltpu

# weights from SplitLoss.__init__ (static constants)
_W = (1.0, 10000.0, 10000.0, 5000.0, 3000.0, 3000.0)
_DEG2RAD = np.pi / 180.0

# grid constants cached per grid_size: only N and sum(x^2 + y^2) are needed
# (sum(x) == sum(y) == 0 for the centered linspace grid — asserted below).
_GRID_CONSTS = {}


def _grid_constants(grid_size):
    if grid_size not in _GRID_CONSTS:
        axis = np.linspace(-1, 1, grid_size)
        X, Y = np.meshgrid(axis, axis)
        x = X.ravel().astype(np.float64)
        y = Y.ravel().astype(np.float64)
        sx, sy = float(np.sum(x)), float(np.sum(y))
        # The kernel relies on the centered-grid symmetry Sx = Sy = 0.
        assert abs(sx) < 1e-9 * x.size and abs(sy) < 1e-9 * y.size, (sx, sy)
        _GRID_CONSTS[grid_size] = (int(x.size), float(np.sum(x * x + y * y)))
    return _GRID_CONSTS[grid_size]


def _make_split_loss_kernel(B, C, n_pts, sr2):
    # All weights, 1/B and 1/(B*N) normalizations and grid constants baked at trace time.
    inv_B = 1.0 / B
    inv_BN = 1.0 / (B * n_pts)
    w0b = np.float32(_W[0] * inv_B)
    w1b = np.float32(_W[1] * inv_B)
    w2b = np.float32(_W[2] * inv_B)
    w_rot = np.float32(_W[3] * inv_BN * 2.0 * sr2)   # weight * 2*Sr2 folded together
    w_sc = np.float32(_W[4] * inv_BN)
    w_sh = np.float32(_W[5] * inv_BN)
    sr2_f = np.float32(sr2)
    n_f = np.float32(n_pts)
    half_rad = np.float32(0.5 * _DEG2RAD)
    two = np.float32(2.0)

    def kernel(x_ref, loss_ref):
        # x_ref: (2, C, B) in VMEM — [0] = theta^T, [1] = theta_GT^T.
        # Batch lives on lanes; each parameter is a lane-dense sublane row.
        th = x_ref[0]       # (C, B)
        thg = x_ref[1]      # (C, B)

        r, rg = th[0:1, :], thg[0:1, :]      # rotation (degrees)
        s, sg = th[1:2, :], thg[1:2, :]      # scale
        ty, tyg = th[2:3, :], thg[2:3, :]    # y-shift

        dr = r - rg
        dsc = s - sg
        dty = ty - tyg

        # plain parameter MSE terms (weights pre-folded with 1/B)
        lane = w0b * (dr * dr) + w1b * (dsc * dsc) + w2b * (dty * dty)   # (1, B)

        # closed-form SequentialGridLoss (Sx = Sy = 0 for the centered grid).
        # Only one transcendental: sin of the half rotation delta.
        sin_half = jnp.sin(half_rad * dr)
        omc = two * sin_half * sin_half                    # 1 - cos(dtheta), well conditioned
        sc_sum = (dsc * dsc + two * s * sg * omc) * sr2_f  # sum_i ||dp||^2 after scale stage
        sh_sum = sc_sum + n_f * (dty * dty)                # after y-shift stage (cross term = 0)
        lane = lane + w_rot * omc + w_sc * sc_sum + w_sh * sh_sum

        if C > 4:  # self-consistency: theta columns 0..2 vs 3..5 (requires C >= 6)
            e0 = th[0:1, :] - th[3:4, :]
            e1 = th[1:2, :] - th[4:5, :]
            e2 = th[2:3, :] - th[5:6, :]
            lane = lane + w0b * (e0 * e0) + w1b * (e1 * e1) + w2b * (e2 * e2)

        # single final reduction, scalar result straight to SMEM
        loss_ref[0, 0] = jnp.sum(lane)

    return kernel


@functools.partial(jax.jit, static_argnames=("grid_size",))
def split_loss(theta, theta_gt, grid_size=20):
    theta = theta.astype(jnp.float32)
    theta_gt = theta_gt.astype(jnp.float32)
    B, C = theta.shape
    if 4 < C < 6:
        raise ValueError("SplitLoss self-consistency branch requires C >= 6 when C > 4")
    n_pts, sr2 = _grid_constants(grid_size)
    kernel = _make_split_loss_kernel(B, C, n_pts, sr2)

    # One stacked, transposed input: one small lane-dense DMA instead of two,
    # batch on lanes (scales to large B without wasting vreg lanes).
    stacked = jnp.stack([theta.T, theta_gt.T], axis=0)    # (2, C, B) f32

    cost = pl.CostEstimate(
        flops=int(40 * B + 16),
        transcendentals=int(B),
        bytes_accessed=int(stacked.size * 4 + 4),
    )

    out = pl.pallas_call(
        kernel,
        out_shape=jax.ShapeDtypeStruct((1, 1), jnp.float32),
        in_specs=[pl.BlockSpec(memory_space=pltpu.MemorySpace.VMEM)],
        out_specs=pl.BlockSpec(memory_space=pltpu.MemorySpace.SMEM),
        cost_estimate=cost,
    )(stacked)
    return out[0, 0]


# ---- pure-JAX reference (mirrors the PyTorch module, full (B, N) warps) ----
def make_point_grid(grid_size=20):
    axis_coords = np.linspace(-1, 1, grid_size)
    X, Y = np.meshgrid(axis_coords, axis_coords)
    P = np.stack((X.ravel(), Y.ravel()), axis=0).astype(np.float32)  # (2, N)
    return jnp.asarray(P)


def split_loss_ref(theta, theta_gt, grid_size=20):
    theta = theta.astype(jnp.float32)
    theta_gt = theta_gt.astype(jnp.float32)
    B, C = theta.shape
    P = make_point_grid(grid_size)
    Px, Py = P[0][None, :], P[1][None, :]

    def mse(a, b):
        d = a - b
        return jnp.mean(d * d)

    mse0 = mse(theta[:, 0], theta_gt[:, 0])
    mse1 = mse(theta[:, 1], theta_gt[:, 1])
    mse2 = mse(theta[:, 2], theta_gt[:, 2])

    t0 = theta[:, 0:1] * _DEG2RAD
    t0g = theta_gt[:, 0:1] * _DEG2RAD
    c, s, cg, sg = jnp.cos(t0), jnp.sin(t0), jnp.cos(t0g), jnp.sin(t0g)
    Pxr, Pyr = c * Px - s * Py, s * Px + c * Py
    Pxrg, Pyrg = cg * Px - sg * Py, sg * Px + cg * Py
    l_rot = jnp.mean((Pxr - Pxrg) ** 2 + (Pyr - Pyrg) ** 2)

    sc, scg = theta[:, 1:2], theta_gt[:, 1:2]
    Pxs, Pys, Pxsg, Pysg = sc * Pxr, sc * Pyr, scg * Pxrg, scg * Pyrg
    l_sc = jnp.mean((Pxs - Pxsg) ** 2 + (Pys - Pysg) ** 2)

    ty, tyg = theta[:, 2:3], theta_gt[:, 2:3]
    l_sh = jnp.mean((Pxs - Pxsg) ** 2 + ((Pys + ty) - (Pysg + tyg)) ** 2)

    w = jnp.asarray(_W, jnp.float32)
    total = jnp.sum(w * jnp.stack([mse0, mse1, mse2, l_rot, l_sc, l_sh]))
    if C > 4:
        total += (_W[0] * mse(theta[:, 0], theta[:, 3]) +
                  _W[1] * mse(theta[:, 1], theta[:, 4]) +
                  _W[2] * mse(theta[:, 2], theta[:, 5]))
    return total


if __name__ == "__main__":
    key = jax.random.PRNGKey(0)
    k1, k2 = jax.random.split(key)
    B, C, GRID = 2, 6, 20  # theta has 6 columns -> exercises the C > 4 branch
    theta = jax.random.normal(k1, (B, C), dtype=jnp.float32)
    theta_gt = jax.random.normal(k2, (B, C), dtype=jnp.float32)

    loss = jax.block_until_ready(split_loss(theta, theta_gt, grid_size=GRID))
    ref = jax.block_until_ready(split_loss_ref(theta, theta_gt, grid_size=GRID))
    np.testing.assert_allclose(np.asarray(loss), np.asarray(ref),
                               rtol=1e-3, atol=1e-2)
    print("KERNEL_OK")
</pallas_src>

<mosaic_0001>
module attributes {stable_mosaic.version = 11 : i64} {
  func.func @kernel(%arg0: memref<2x6x2xf32, #tpu.memory_space<vmem>>, %arg1: memref<1x1xf32, #tpu.memory_space<smem>>) attributes {dimension_semantics = [], scalar_prefetch = 0 : i64, scratch_operands = 0 : i64, tpu.core_type = #tpu.core_type<tc>} {
    %c0 = arith.constant 0 : index
    %c0_0 = arith.constant 0 : index
    %c0_1 = arith.constant 0 : index
    %0 = vector.load %arg0[%c0, %c0_0, %c0_1] : memref<2x6x2xf32, #tpu.memory_space<vmem>>, vector<1x6x2xf32>
    %1 = vector.shape_cast %0 : vector<1x6x2xf32> to vector<6x2xf32>
    %c1 = arith.constant 1 : index
    %c0_2 = arith.constant 0 : index
    %c0_3 = arith.constant 0 : index
    %2 = vector.load %arg0[%c1, %c0_2, %c0_3] : memref<2x6x2xf32, #tpu.memory_space<vmem>>, vector<1x6x2xf32>
    %3 = vector.shape_cast %2 : vector<1x6x2xf32> to vector<6x2xf32>
    %4 = vector.extract_strided_slice %1 {offsets = [0, 0], sizes = [1, 2], strides = [1, 1]} : vector<6x2xf32> to vector<1x2xf32>
    %5 = vector.extract_strided_slice %3 {offsets = [0, 0], sizes = [1, 2], strides = [1, 1]} : vector<6x2xf32> to vector<1x2xf32>
    %6 = vector.extract_strided_slice %1 {offsets = [1, 0], sizes = [1, 2], strides = [1, 1]} : vector<6x2xf32> to vector<1x2xf32>
    %7 = vector.extract_strided_slice %3 {offsets = [1, 0], sizes = [1, 2], strides = [1, 1]} : vector<6x2xf32> to vector<1x2xf32>
    %8 = vector.extract_strided_slice %1 {offsets = [2, 0], sizes = [1, 2], strides = [1, 1]} : vector<6x2xf32> to vector<1x2xf32>
    %9 = vector.extract_strided_slice %3 {offsets = [2, 0], sizes = [1, 2], strides = [1, 1]} : vector<6x2xf32> to vector<1x2xf32>
    %10 = arith.subf %4, %5 : vector<1x2xf32>
    %11 = arith.subf %6, %7 : vector<1x2xf32>
    %12 = arith.subf %8, %9 : vector<1x2xf32>
    %13 = arith.mulf %10, %10 : vector<1x2xf32>
    %cst = arith.constant 5.000000e-01 : f32
    %14 = vector.broadcast %cst : f32 to vector<1x2xf32>
    %15 = arith.mulf %14, %13 : vector<1x2xf32>
    %16 = arith.mulf %11, %11 : vector<1x2xf32>
    %cst_4 = arith.constant 5.000000e+03 : f32
    %17 = vector.broadcast %cst_4 : f32 to vector<1x2xf32>
    %18 = arith.mulf %17, %16 : vector<1x2xf32>
    %19 = arith.addf %15, %18 : vector<1x2xf32>
    %20 = arith.mulf %12, %12 : vector<1x2xf32>
    %cst_5 = arith.constant 5.000000e+03 : f32
    %21 = vector.broadcast %cst_5 : f32 to vector<1x2xf32>
    %22 = arith.mulf %21, %20 : vector<1x2xf32>
    %23 = arith.addf %19, %22 : vector<1x2xf32>
    %cst_6 = arith.constant 0.00872664619 : f32
    %24 = vector.broadcast %cst_6 : f32 to vector<1x2xf32>
    %25 = arith.mulf %24, %10 : vector<1x2xf32>
    %26 = math.sin %25 : vector<1x2xf32>
    %cst_7 = arith.constant 2.000000e+00 : f32
    %27 = vector.broadcast %cst_7 : f32 to vector<1x2xf32>
    %28 = arith.mulf %27, %26 : vector<1x2xf32>
    %29 = arith.mulf %28, %26 : vector<1x2xf32>
    %30 = arith.mulf %11, %11 : vector<1x2xf32>
    %cst_8 = arith.constant 2.000000e+00 : f32
    %31 = vector.broadcast %cst_8 : f32 to vector<1x2xf32>
    %32 = arith.mulf %31, %6 : vector<1x2xf32>
    %33 = arith.mulf %32, %7 : vector<1x2xf32>
    %34 = arith.mulf %33, %29 : vector<1x2xf32>
    %35 = arith.addf %30, %34 : vector<1x2xf32>
    %cst_9 = arith.constant 294.736847 : f32
    %36 = vector.broadcast %cst_9 : f32 to vector<1x2xf32>
    %37 = arith.mulf %35, %36 : vector<1x2xf32>
    %38 = arith.mulf %12, %12 : vector<1x2xf32>
    %cst_10 = arith.constant 4.000000e+02 : f32
    %39 = vector.broadcast %cst_10 : f32 to vector<1x2xf32>
    %40 = arith.mulf %39, %38 : vector<1x2xf32>
    %41 = arith.addf %37, %40 : vector<1x2xf32>
    %cst_11 = arith.constant 3684.21045 : f32
    %42 = vector.broadcast %cst_11 : f32 to vector<1x2xf32>
    %43 = arith.mulf %42, %29 : vector<1x2xf32>
    %44 = arith.addf %23, %43 : vector<1x2xf32>
    %cst_12 = arith.constant 3.750000e+00 : f32
    %45 = vector.broadcast %cst_12 : f32 to vector<1x2xf32>
    %46 = arith.mulf %45, %37 : vector<1x2xf32>
    %47 = arith.addf %44, %46 : vector<1x2xf32>
    %cst_13 = arith.constant 3.750000e+00 : f32
    %48 = vector.broadcast %cst_13 : f32 to vector<1x2xf32>
    %49 = arith.mulf %48, %41 : vector<1x2xf32>
    %50 = arith.addf %47, %49 : vector<1x2xf32>
    %51 = vector.extract_strided_slice %1 {offsets = [0, 0], sizes = [1, 2], strides = [1, 1]} : vector<6x2xf32> to vector<1x2xf32>
    %52 = vector.extract_strided_slice %1 {offsets = [3, 0], sizes = [1, 2], strides = [1, 1]} : vector<6x2xf32> to vector<1x2xf32>
    %53 = arith.subf %51, %52 : vector<1x2xf32>
    %54 = vector.extract_strided_slice %1 {offsets = [1, 0], sizes = [1, 2], strides = [1, 1]} : vector<6x2xf32> to vector<1x2xf32>
    %55 = vector.extract_strided_slice %1 {offsets = [4, 0], sizes = [1, 2], strides = [1, 1]} : vector<6x2xf32> to vector<1x2xf32>
    %56 = arith.subf %54, %55 : vector<1x2xf32>
    %57 = vector.extract_strided_slice %1 {offsets = [2, 0], sizes = [1, 2], strides = [1, 1]} : vector<6x2xf32> to vector<1x2xf32>
    %58 = vector.extract_strided_slice %1 {offsets = [5, 0], sizes = [1, 2], strides = [1, 1]} : vector<6x2xf32> to vector<1x2xf32>
    %59 = arith.subf %57, %58 : vector<1x2xf32>
    %60 = arith.mulf %53, %53 : vector<1x2xf32>
    %cst_14 = arith.constant 5.000000e-01 : f32
    %61 = vector.broadcast %cst_14 : f32 to vector<1x2xf32>
    %62 = arith.mulf %61, %60 : vector<1x2xf32>
    %63 = arith.addf %50, %62 : vector<1x2xf32>
    %64 = arith.mulf %56, %56 : vector<1x2xf32>
    %cst_15 = arith.constant 5.000000e+03 : f32
    %65 = vector.broadcast %cst_15 : f32 to vector<1x2xf32>
    %66 = arith.mulf %65, %64 : vector<1x2xf32>
    %67 = arith.addf %63, %66 : vector<1x2xf32>
    %68 = arith.mulf %59, %59 : vector<1x2xf32>
    %cst_16 = arith.constant 5.000000e+03 : f32
    %69 = vector.broadcast %cst_16 : f32 to vector<1x2xf32>
    %70 = arith.mulf %69, %68 : vector<1x2xf32>
    %71 = arith.addf %67, %70 : vector<1x2xf32>
    %72 = vector.shape_cast %71 : vector<1x2xf32> to vector<1x1x2xf32>
    %cst_17 = arith.constant dense<0.000000e+00> : vector<1xf32>
    %73 = vector.multi_reduction <add>, %72, %cst_17 [1, 2] : vector<1x1x2xf32> to vector<1xf32>
    %74 = vector.shape_cast %73 : vector<1xf32> to vector<1x1x1xf32>
    %75 = vector.extract %74[0, 0, 0] : f32 from vector<1x1x1xf32>
    %c0_18 = arith.constant 0 : index
    %c0_19 = arith.constant 0 : index
    %76 = memref.load %arg1[%c0_18, %c0_19] : memref<1x1xf32, #tpu.memory_space<smem>>
    memref.store %75, %arg1[%c0_18, %c0_19] : memref<1x1xf32, #tpu.memory_space<smem>>
    return
  }
}

</mosaic_0001>

<llo_original>
// kernel: split_loss.1
$region0: #{split_loss.1}
  #allocation0 [shape = 'u32[]', space=smem, size = 0x4, offset = 0x4, fixed_abs, tag = 'smem constant byte address 0x4 - core index']
  #allocation1 [shape = 'u32[144,128]{1,0:T(1,128)}', space=vmem, size = 0x12000, scoped, tag = 'internal scratch']
  %s0 = inlined_call_operand.vmem [shape: f32[2,6,2], index: 0, kind: input, shape index: {}]
  %s1 = inlined_call_operand.hbm [shape: f32[1,1], index: 1, kind: output, shape index: {}]
  %s2 = sld [smem:[#allocation0]]
  $region14: #{split_loss.1} parent=0
    _
  %s4 = ssub.s32 1, %s2
  %s5 = scalar_select 0, %s4, %s2
  $region1: #{split_loss.1} parent=0
    #allocation2 [shape = 'u8[512]{0}', space=smem, size = 0x200, scoped, tag = 'output window, operand 0, single buffered']
    #allocation3 [shape = 's32[1]{0}', space=sflag, size = 0x4, scoped, tag = 'scoped memory for split_loss.1']
    %6 = vsyncpa [#allocation3], 0
    // Predicated region
    $region2: #{split_loss.1} parent=1 // pred_check
      _
    $region3: #{split_loss.1} parent=1 // pred_check_branch
      %8 = sbr.rel (0) target = $region5
    $region4: #{split_loss.1} parent=1 // pred_region
      _
    $region5: #{split_loss.1} parent=1 // pred_fallthru
      _
    %v9 = vld [vmem:[%s0] sm:$0x3f]
    %s10 = scalar_lea.vmem %s0, 8
    %v11 = vld [vmem:[%s10] sm:$0x3f]
    %v12 = vsub.f32 %v9, %v11
    %v13 = vmul.f32 %v12, %v12
    %v14 = vmul.f32 %v13, 0.5
    %v15 = vmul.f32 %v13, 5000.0
    %v17 = vrot.slane %v15, 1
    %v19 = vadd.f32 %v14, %v17
    %v20 = vrot.slane %v15, 2
    %v22 = vadd.f32 %v19, %v20
    %v23 = vmul.f32 %v12, 0.008726646
    %v24 = vand.u32 2147483647, %v23
    %vm25 = vcmp.le.f32.partialorder %v24, 0.7853982
    %vm26 = vcmp.lt.s32.totalorder %v23, 0
    %v27 = vand.u32 %v23, 2139095040
    %v28 = vshrl.u32 %v27, 23
    %v29 = vsub.s32 %v28, 127
    %v30 = vand.u32 2147483647, %v23
    %v31 = vand.u32 %v30, 8388607
    %v32 = vor.u32 %v31, 8388608
    %v33 = vsub.s32 0, %v32
    %v34 = vadd.s32 %v29, 1
    %vm35 = vcmp.gt.s32.totalorder %v34, 0
    %v36 = vsel %vm35, %v34, 0
    %v37 = vshrl.u32 %v36, 5
    %v38 = vand.u32 %v36, 31
    %v39 = vsub.s32 32, %v38
    %v40 = vshrl.u32 683565275, %v39
    %v41 = vshll.u32 683565275, %v38
    %v42 = vshrl.u32 2475754826, %v39
    %v43 = vor.u32 %v41, %v42
    %v44 = vshll.u32 2475754826, %v38
    %v45 = vshrl.u32 2131351028, %v39
    %v46 = vor.u32 %v44, %v45
    %v47 = vshll.u32 2131351028, %v38
    %v48 = vshrl.u32 2102212464, %v39
    %v49 = vor.u32 %v47, %v48
    %v50 = vshll.u32 2102212464, %v38
    %v51 = vshrl.u32 920167782, %v39
    %v52 = vor.u32 %v50, %v51
    %v53 = vshll.u32 920167782, %v38
    %v54 = vshrl.u32 1326507024, %v39
    %v55 = vor.u32 %v53, %v54
    %vm56 = vcmp.lt.s32.totalorder %v37, 1
    %vm57 = vcmp.lt.s32.totalorder %v37, 2
    %vm58 = vcmp.lt.s32.totalorder %v37, 3
    %vm59 = vcmp.lt.s32.totalorder %v37, 4
    %v60 = vsel %vm56, %v40, %v43
    %v61 = vsel %vm59, %v49, 2102212464
    %v62 = vsel %vm58, %v46, %v61
    %v63 = vsel %vm57, %v60, %v62
    %v64 = vsel %vm56, %v43, %v46
    %v65 = vsel %vm59, %v52, 920167782
    %v66 = vsel %vm58, %v49, %v65
    %v67 = vsel %vm57, %v64, %v66
    %v68 = vsel %vm56, %v46, %v49
    %v69 = vsel %vm59, %v55, 1326507024
    %v70 = vsel %vm58, %v52, %v69
    %v71 = vsel %vm57, %v68, %v70
    %v72 = vshll.u32 %v32, 8
    %v73 = vmul.u32.u64.compose %v72, %v71
    %v74 = vextract.low.u32 %v73
    %v75 = vextract.high.u32 %v73
    %v76 = vmul.u32.u64.compose %v72, %v67
    %v77 = vextract.low.u32 %v76
    %v78 = vextract.high.u32 %v76
    %v79 = vmul.u32 %v72, %v63
    %v80 = vadd.s32 %v75, %v77
    %vm81 = vc.u32 %v75, %v77
    %v82 = vadd.s32 %v78, 1
    %v83 = vsel %vm81, %v82, %v78
    %v84 = vadd.s32 %v79, %v83
    %v85 = vadd.s32 %v84, 536870912
    %v86 = vshrl.u32 %v85, 30
    %v87 = vshll.u32 %v86, 30
    %v88 = vsub.s32 %v84, %v87
    %vm89 = vcmp.lt.s32.totalorder %v88, 0
    %v90 = vsub.s32 0, %v88
    %v91 = vsel %vm89, %v90, %v88
    %v92 = vclz %v91
    %v93 = vsub.s32 %v92, 2
    %vm94 = vcmp.gt.s32.totalorder 0, %v93
    %v95 = vsel %vm94, 0, %v93
    %v96 = vsub.s32 32, %v95
    %v97 = vshll.u32 %v88, %v95
    %v98 = vshrl.u32 %v80, %v96
    %v99 = vor.u32 %v97, %v98
    %v100 = vsub.s32 4294967266, %v95
    %v101 = vadd.s32 %v100, 127
    %v102 = vshll.u32 %v101, 23
    %v103 = vor.u32 4788187, %v102
    %v104 = vand.u32 2147483647, %v103
    %v106 = vcvt.s32.f32 %v99
    %v107 = vmul.f32 %v106, %v104
    %v108 = vxor.u32 %v107, 2147483648
    %v109 = vsel %vm26, %v108, %v107
    %v110 = vsub.s32 4, %v86
    %v111 = vsel %vm26, %v110, %v86
    %v112 = vsel %vm25, %v23, %v109
    %v113 = vsel %vm25, 0, %v111
    %v114 = vcosq.f32.pop %v112
    %v115 = vsinq.f32.pop %v112
    %vm116 = vweird.f32 %v23
    %v117 = vadd.s32 %v113, 3
    %v118 = vand.u32 %v117, 3
    %vm119 = vcmp.lt.s32.totalorder %v118, 2
    %vm120 = vcmp.eq.s32.totalorder %v118, 0
    %v121 = vxor.u32 %v115, 2147483648
    %v122 = vsel %vm120, %v114, %v121
    %vm123 = vcmp.eq.s32.totalorder %v118, 2
    %v124 = vxor.u32 %v114, 2147483648
    %v125 = vsel %vm123, %v124, %v115
    %v126 = vsel %vm119, %v122, %v125
    %v127 = vsel %vm116, nan, %v126
    %v128 = vmul.f32 %v127, 2.0
    %v129 = vmul.f32 %v128, %v127
    %v130 = vmul.f32 %v9, 2.0
    %v131 = vmul.f32 %v130, %v11
    %v133 = vrot.slane %v129, 7
    %v135 = vmul.f32 %v131, %v133
    %v136 = vadd.f32 %v13, %v135
    %v137 = vmul.f32 %v136, 294.73685
    %v138 = vmul.f32 %v13, 400.0
    %v140 = vrot.slane %v138, 1
    %v142 = vadd.f32 %v137, %v140
    %v143 = vmul.f32 %v129, 3684.2104
    %v144 = vadd.f32 %v22, %v143
    %v145 = vmul.f32 %v137, 3.75
    %v147 = vrot.slane %v145, 1
    %v149 = vadd.f32 %v144, %v147
    %v150 = vmul.f32 %v142, 3.75
    %v152 = vrot.slane %v150, 1
    %v154 = vadd.f32 %v149, %v152
    %v156 = vrot.slane %v9, 3
    %v158 = vsub.f32 %v9, %v156
    %v159 = vmul.f32 %v158, %v158
    %v160 = vmul.f32 %v159, 0.5
    %v161 = vadd.f32 %v154, %v160
    %v162 = vmul.f32 %v159, 5000.0
    %v164 = vrot.slane %v162, 1
    %v166 = vadd.f32 %v161, %v164
    %v167 = vrot.slane %v162, 2
    %v169 = vadd.f32 %v166, %v167
    %vm170 = vcmask 8192
    %v171 = vsel %vm170, %v169, 0.0
    %172 = vadd.xlane.f32.xlu0 %v171
    %v173 = vpop.xlane.xlu0 %172
    %v174 = vrot.slane %v173, 4
    %v175 = vadd.f32 %v173, %v174
    %v176 = vrot.slane %v175, 2
    %v177 = vadd.f32 %v175, %v176
    %v178 = vrot.slane %v177, 1
    %v179 = vadd.f32 %v177, %v178
    %s180 = vtos %v179
    %s181 = scalar_lea.smem [#allocation2], 0
    %182 = sst [smem:[%s181]] %s180
    // Predicated region
    $region6: #{split_loss.1} parent=1 // pred_check
      _
    $region7: #{split_loss.1} parent=1 // pred_check_branch
      %184 = sbr.rel (0) target = $region9
    $region8: #{split_loss.1} parent=1 // pred_region
      %s186 = ssub.s32 16, 16
      %187 = vsyncadd [#allocation3], %s186
      %190 = dma.smem_to_hbm [#allocation2], 16, %s1, [#allocation3]
    $region9: #{split_loss.1} parent=1 // pred_fallthru
      _
    // Predicated region
    $region10: #{split_loss.1} parent=1 // pred_check
      _
    $region11: #{split_loss.1} parent=1 // pred_check_branch
      %192 = sbr.rel (0) target = $region13
    $region12: #{split_loss.1} parent=1 // pred_region
      %193 = dma.done [#allocation3], 16
    $region13: #{split_loss.1} parent=1 // pred_fallthru
      _
    %194 = sfence
    %195 = vsyncpa [#allocation3], 1

</llo_original>
